<compile_context>
chip_gen: v5e
topology: v5e:2x2
jax: 0.10.0
libtpu: 0.0.40
codegen_flags: <defaults>
</compile_context>

<pallas_src>
import jax
import jax.numpy as jnp
from jax.experimental import pallas as pl
from jax.experimental.pallas import tpu as pltpu


def _gaussian_pdf_kernel(p_ref, x_ref, o_ref):
    # p_ref: SMEM f32[6] = [mu0, mu1, a00, a01, a11, c]  (-0.5 folded into a*)
    # x_ref: VMEM f32[2, R, 128]   (feature on leading axis; batch dense in sublanes+lanes)
    # o_ref: VMEM f32[R, 128]
    d0 = x_ref[0] - p_ref[0]                          # (R, 128) full vregs
    d1 = x_ref[1] - p_ref[1]                          # (R, 128)
    q = p_ref[2] * (d0 * d0) + p_ref[3] * (d0 * d1) + p_ref[4] * (d1 * d1)
    o_ref[...] = p_ref[5] * jnp.exp(q)                # EUP exp, unmasked full-vreg store


def my_gaussian_pdf(x, mu, cov, c=1.0, *, block_rows=2048):
    """x: (N, 2) f32, mu: (2,) f32, cov: (2, 2) f32 -> (N,) f32.

    block_rows * 128 elements are processed per grid step (default 256K
    elements ~= 3 MiB of f32 traffic per step, ~6 MiB double-buffered, which
    fits v5e's 16 MiB scoped-VMEM default with headroom).
    """
    x = jnp.asarray(x, jnp.float32)
    mu = jnp.asarray(mu, jnp.float32).reshape(2)
    cov = jnp.asarray(cov, jnp.float32)
    n = x.shape[0]

    # Scalar parameters for SMEM: means, folded quadratic coefficients, scale.
    params = jnp.stack(
        [
            mu[0],
            mu[1],
            -0.5 * cov[0, 0],
            -0.5 * (cov[0, 1] + cov[1, 0]),   # handles non-symmetric cov too
            -0.5 * cov[1, 1],
            jnp.asarray(c, jnp.float32),
        ]
    ).astype(jnp.float32)

    # ---- layout / tiling ---------------------------------------------------
    rows = pl.cdiv(n, 128)                              # 128-lane rows of the batch
    # >= 2 grid steps once the batch is big enough so v7x's two TCs both work;
    # otherwise a single step.
    steps = max(pl.cdiv(rows, block_rows), 2 if rows >= 16 else 1)
    r_blk = ((pl.cdiv(rows, steps) + 7) // 8) * 8       # rows per step, multiple of 8
    rows_pad = steps * r_blk
    n_pad = rows_pad * 128                              # pad is O(1024*steps), not a full tile

    # SoA (2, rows_pad, 128) slab: batch is lane- and sublane-dense.
    # TODO(synk): if the producer can hand x over already in (2, N) SoA layout,
    # this transpose (one extra HBM read+write of x) disappears entirely.
    x_soa = jnp.pad(x, ((0, n_pad - n), (0, 0))).T.reshape(2, rows_pad, 128)

    n_elems = rows_pad * 128
    cost = pl.CostEstimate(
        flops=8 * n_elems, transcendentals=n_elems, bytes_accessed=12 * n_elems
    )

    out = pl.pallas_call(
        _gaussian_pdf_kernel,
        out_shape=jax.ShapeDtypeStruct((rows_pad, 128), jnp.float32),
        grid_spec=pltpu.PrefetchScalarGridSpec(
            num_scalar_prefetch=1,                      # params -> SMEM
            grid=(steps,),
            in_specs=[pl.BlockSpec((2, r_blk, 128), lambda i, p: (0, i, 0))],
            out_specs=pl.BlockSpec((r_blk, 128), lambda i, p: (i, 0)),
        ),
        compiler_params=pltpu.CompilerParams(
            dimension_semantics=("parallel",),          # shard row-tiles across TCs
        ),
        cost_estimate=cost,
    )(params, x_soa)

    return out.reshape(-1)[:n]                          # drop padded tail


if __name__ == "__main__":
    key = jax.random.PRNGKey(0)
    kx, kmu = jax.random.split(key)

    D = 2
    N = 300                                             # small batch: padding + single-step path
    x = jax.random.normal(kx, (N, D), dtype=jnp.float32)
    mu = jax.random.normal(kmu, (D,), dtype=jnp.float32)
    cov = 0.54 * jnp.eye(D, dtype=jnp.float32)          # as in MyGaussianPDF.__init__
    c = 1.0

    out = jax.block_until_ready(my_gaussian_pdf(x, mu, cov, c))

    # Pure-JAX reference mirroring the PyTorch forward exactly.
    d = x - mu
    ref = c * jnp.exp(-0.5 * jnp.diagonal(d @ cov @ d.T))
    assert out.shape == (N,)
    assert jnp.allclose(out, ref, rtol=1e-5, atol=1e-6), (out, ref)

    # Multi-step grid with a ragged tail (small block_rows forces several tiles).
    N2 = 4096 + 37
    x2 = jax.random.normal(jax.random.PRNGKey(1), (N2, D), dtype=jnp.float32)
    out2 = jax.block_until_ready(my_gaussian_pdf(x2, mu, cov, c, block_rows=8))
    d2 = x2 - mu
    ref2 = c * jnp.exp(-0.5 * jnp.einsum("ni,ij,nj->n", d2, cov, d2))
    assert out2.shape == (N2,)
    assert jnp.allclose(out2, ref2, rtol=1e-5, atol=1e-6)

    print("KERNEL_OK")
</pallas_src>

<mosaic_0001>
module attributes {stable_mosaic.version = 11 : i64} {
  func.func @_gaussian_pdf_kernel(%arg0: i32, %arg1: memref<6xf32, #tpu.memory_space<smem>>, %arg2: memref<2x8x128xf32, #tpu.memory_space<vmem>>, %arg3: memref<8x128xf32, #tpu.memory_space<vmem>>) attributes {dimension_semantics = [#tpu.dimension_semantics<parallel>], iteration_bounds = array<i64: 1>, scalar_prefetch = 1 : i64, scratch_operands = 0 : i64, tpu.core_type = #tpu.core_type<tc>, window_params = [{transform_indices = @transform_0, window_bounds = array<i64: 2, 8, 128>}, {transform_indices = @transform_1, window_bounds = array<i64: 8, 128>}]} {
    %c0 = arith.constant 0 : index
    %c0_0 = arith.constant 0 : index
    %c0_1 = arith.constant 0 : index
    %0 = vector.load %arg2[%c0, %c0_0, %c0_1] : memref<2x8x128xf32, #tpu.memory_space<vmem>>, vector<1x8x128xf32>
    %1 = vector.shape_cast %0 : vector<1x8x128xf32> to vector<8x128xf32>
    %c0_2 = arith.constant 0 : index
    %2 = memref.load %arg1[%c0_2] : memref<6xf32, #tpu.memory_space<smem>>
    %3 = vector.broadcast %2 : f32 to vector<8x128xf32>
    %4 = arith.subf %1, %3 : vector<8x128xf32>
    %c1 = arith.constant 1 : index
    %c0_3 = arith.constant 0 : index
    %c0_4 = arith.constant 0 : index
    %5 = vector.load %arg2[%c1, %c0_3, %c0_4] : memref<2x8x128xf32, #tpu.memory_space<vmem>>, vector<1x8x128xf32>
    %6 = vector.shape_cast %5 : vector<1x8x128xf32> to vector<8x128xf32>
    %c1_5 = arith.constant 1 : index
    %7 = memref.load %arg1[%c1_5] : memref<6xf32, #tpu.memory_space<smem>>
    %8 = vector.broadcast %7 : f32 to vector<8x128xf32>
    %9 = arith.subf %6, %8 : vector<8x128xf32>
    %c2 = arith.constant 2 : index
    %10 = memref.load %arg1[%c2] : memref<6xf32, #tpu.memory_space<smem>>
    %11 = arith.mulf %4, %4 : vector<8x128xf32>
    %12 = vector.broadcast %10 : f32 to vector<8x128xf32>
    %13 = arith.mulf %12, %11 : vector<8x128xf32>
    %c3 = arith.constant 3 : index
    %14 = memref.load %arg1[%c3] : memref<6xf32, #tpu.memory_space<smem>>
    %15 = arith.mulf %4, %9 : vector<8x128xf32>
    %16 = vector.broadcast %14 : f32 to vector<8x128xf32>
    %17 = arith.mulf %16, %15 : vector<8x128xf32>
    %18 = arith.addf %13, %17 : vector<8x128xf32>
    %c4 = arith.constant 4 : index
    %19 = memref.load %arg1[%c4] : memref<6xf32, #tpu.memory_space<smem>>
    %20 = arith.mulf %9, %9 : vector<8x128xf32>
    %21 = vector.broadcast %19 : f32 to vector<8x128xf32>
    %22 = arith.mulf %21, %20 : vector<8x128xf32>
    %23 = arith.addf %18, %22 : vector<8x128xf32>
    %c5 = arith.constant 5 : index
    %24 = memref.load %arg1[%c5] : memref<6xf32, #tpu.memory_space<smem>>
    %25 = math.exp %23 : vector<8x128xf32>
    %26 = vector.broadcast %24 : f32 to vector<8x128xf32>
    %27 = arith.mulf %26, %25 : vector<8x128xf32>
    %c0_6 = arith.constant 0 : index
    %c0_7 = arith.constant 0 : index
    %28 = vector.load %arg3[%c0_6, %c0_7] : memref<8x128xf32, #tpu.memory_space<vmem>>, vector<8x128xf32>
    tpu.vector_store %arg3[%c0_6, %c0_7], %27 {strides = array<i32>} : memref<8x128xf32, #tpu.memory_space<vmem>>, vector<8x128xf32>,
    return
  }
  func.func @transform_0(%arg0: i32, %arg1: memref<6xf32, #tpu.memory_space<smem>>) -> (i32, i32, i32) {
    %c0_i32 = arith.constant 0 : i32
    %c0_i32_0 = arith.constant 0 : i32
    %c0_i32_1 = arith.constant 0 : i32
    return %c0_i32, %arg0, %c0_i32_0 : i32, i32, i32
  }
  func.func @transform_1(%arg0: i32, %arg1: memref<6xf32, #tpu.memory_space<smem>>) -> (i32, i32) {
    %c0_i32 = arith.constant 0 : i32
    %c0_i32_0 = arith.constant 0 : i32
    return %arg0, %c0_i32 : i32, i32
  }
}

</mosaic_0001>

<llo_original>
// kernel: tpu_custom_call.1
$region0: #{tpu_custom_call.1}
  #allocation0 [shape = 'u32[]', space=smem, size = 0x4, offset = 0x4, fixed_abs, tag = 'smem constant byte address 0x4 - core index']
  #allocation1 [shape = 'u32[72,128]{1,0:T(1,128)}', space=vmem, size = 0x9000, scoped, tag = 'internal scratch']
  #allocation2 [shape = 's32[1]{0}', space=sflag, size = 0x4, scoped, tag = 'scoped memory for tpu_custom_call.1']
  #allocation3 [shape = 'u8[512]{0}', space=smem, size = 0x200, scoped, tag = 'prefetched SMEM operand 0']
  %s0 = inlined_call_operand.hbm [shape: f32[6], index: 0, kind: input, shape index: {}]
  %s1 = inlined_call_operand.hbm [shape: f32[2,8,128], index: 1, kind: input, shape index: {}]
  %s2 = inlined_call_operand.hbm [shape: f32[8,128], index: 2, kind: output, shape index: {}]
  %s3 = sld [smem:[#allocation0]]
  $region18: #{tpu_custom_call.1} parent=0
    _
  %s5 = ssub.s32 1, %s3
  %s6 = scalar_select 0, %s5, %s3
  %s8 = sshll.u32 %s0, 4
  %s9 = int_to_ptr.hbm [resolvable:$true] %s8
  %11 = dma.hbm_to_smem %s9, 16, [#allocation3], [#allocation2]
  %13 = dma.done [#allocation2], 16
  %14 = sfence
  $region1: #{tpu_custom_call.1} parent=0
    #allocation4 [shape = 'u8[8192]{0}', space=vmem, size = 0x2000, scoped, tag = 'input window, operand 1, single buffered']
    #allocation5 [shape = 's32[1]{0}', space=sflag, size = 0x4, scoped, tag = 'scoped memory for tpu_custom_call.1']
    #allocation6 [shape = 's32[1]{0}', space=sflag, size = 0x4, scoped, tag = 'scoped memory for tpu_custom_call.1']
    #allocation7 [shape = 'u8[4096]{0}', space=vmem, size = 0x1000, scoped, tag = 'output window, operand 0, single buffered']
    %15 = vsyncpa [#allocation5], 0
    %16 = vsyncpa [#allocation6], 0
    // Predicated region
    $region2: #{tpu_custom_call.1} parent=1 // pred_check
      _
    $region3: #{tpu_custom_call.1} parent=1 // pred_check_branch
      %18 = sbr.rel (0) target = $region5
    $region4: #{tpu_custom_call.1} parent=1 // pred_region
      %20 = vsyncadd [#allocation5], 0
      %s21 = sshll.u32 %s1, 4
      %s22 = int_to_ptr.hbm [resolvable:$true] %s21
      %s23 = sshll.u32 [#allocation4], 4
      %s24 = int_to_ptr.vmem [resolvable:$true] %s23
      %29 = dma.hbm_to_vmem [thread:$0]  %s22, 256, %s24, [#allocation5], 128, 128, 8
    $region5: #{tpu_custom_call.1} parent=1 // pred_fallthru
      _
    // Predicated region
    $region6: #{tpu_custom_call.1} parent=1 // pred_check
      _
    $region7: #{tpu_custom_call.1} parent=1 // pred_check_branch
      %31 = sbr.rel (0) target = $region9
    $region8: #{tpu_custom_call.1} parent=1 // pred_region
      %33 = dma.done [#allocation5], 256
    $region9: #{tpu_custom_call.1} parent=1 // pred_fallthru
      _
    %v34 = vld [vmem:[#allocation4] sm:$0xff]
    %s35 = sld [smem:[#allocation3]]
    %v36 = vstv %s35
    %v37 = vsub.f32 %v34, %v36
    %s38 = scalar_lea.vmem [#allocation4], 8
    %v39 = vld [vmem:[%s38] sm:$0xff]
    %s40 = sld [smem:[#allocation3 + $0x1]]
    %v41 = vstv %s40
    %v42 = vsub.f32 %v39, %v41
    %s43 = sld [smem:[#allocation3 + $0x2]]
    %v44 = vmul.f32 %v37, %v37
    %v45 = vstv %s43
    %v46 = vmul.f32 %v45, %v44
    %s47 = sld [smem:[#allocation3 + $0x3]]
    %v48 = vmul.f32 %v37, %v42
    %v49 = vstv %s47
    %v50 = vmul.f32 %v49, %v48
    %v51 = vadd.f32 %v46, %v50
    %s52 = sld [smem:[#allocation3 + $0x4]]
    %v53 = vmul.f32 %v42, %v42
    %v54 = vstv %s52
    %v55 = vmul.f32 %v54, %v53
    %v56 = vadd.f32 %v51, %v55
    %s57 = sld [smem:[#allocation3 + $0x5]]
    %v58 = vmul.f32 %v56, 1.442695
    %v59 = vpow.pop %v58
    %v60 = vstv %s57
    %v61 = vmul.f32 %v60, %v59
    %62 = vst [vmem:[#allocation7] sm:$0xff] %v61
    // Predicated region
    $region10: #{tpu_custom_call.1} parent=1 // pred_check
      _
    $region11: #{tpu_custom_call.1} parent=1 // pred_check_branch
      %64 = sbr.rel (0) target = $region13
    $region12: #{tpu_custom_call.1} parent=1 // pred_region
      %66 = vsyncadd [#allocation6], 0
      %s68 = sshll.u32 [#allocation7], 4
      %s69 = int_to_ptr.vmem [resolvable:$true] %s68
      %s70 = sshll.u32 %s2, 4
      %s71 = int_to_ptr.hbm [resolvable:$true] %s70
      %73 = dma.vmem_to_hbm [thread:$0]  %s69, 128, %s71, [#allocation6]
    $region13: #{tpu_custom_call.1} parent=1 // pred_fallthru
      _
    // Predicated region
    $region14: #{tpu_custom_call.1} parent=1 // pred_check
      _
    $region15: #{tpu_custom_call.1} parent=1 // pred_check_branch
      %75 = sbr.rel (0) target = $region17
    $region16: #{tpu_custom_call.1} parent=1 // pred_region
      %77 = dma.done [#allocation6], 128
    $region17: #{tpu_custom_call.1} parent=1 // pred_fallthru
      _
    %78 = vsyncpa [#allocation5], 1
    %79 = vsyncpa [#allocation6], 1

</llo_original>
